<compile_context>
chip_gen: v7x
topology: tpu7x:2x2x1
jax: 0.10.0
libtpu: 0.0.40
codegen_flags: <defaults>
</compile_context>

<pallas_src>
import functools

import jax
import jax.numpy as jnp
from jax.experimental import pallas as pl
from jax.experimental.pallas import tpu as pltpu


def _round_up(a: int, b: int) -> int:
    return ((a + b - 1) // b) * b


def _cdiv(a: int, b: int) -> int:
    return (a + b - 1) // b


def _rd_encoder_kernel(x_ref, sel_ref, params_ref, o_ref):
    # x_ref:      (pack, TM)  f32  lane-dense packed x; column r holds logical rows
    #                              r*pack .. r*pack+pack-1
    # sel_ref:    (pack, W)   f32  0/1 selector, sel[p, j] = 1 iff j // H == p
    # params_ref: (3, W)      f32  rows: [mean, inv_std*sqrt(0.5), inv_std/sqrt(2*pi)]
    # o_ref:      (TM, W)          lane-dense output tile (W = pack*H, multiple of 128)
    x = jax.lax.dot_general(
        x_ref[...],
        sel_ref[...],
        dimension_numbers=(((0,), (0,)), ((), ())),    # contract the pack dim -> (TM, W)
        precision=jax.lax.Precision.HIGHEST,           # exact 0/1 selection; keep HIGHEST
        preferred_element_type=jnp.float32,
    )
    mean = params_ref[0:1, :]
    s = params_ref[1:2, :]        # sqrt(0.5) / (|std| + 0.01)
    coeff = params_ref[2:3, :]    # 1 / ((|std| + 0.01) * sqrt(2*pi))
    t = (x - mean) * s
    o_ref[...] = (jnp.exp(-(t * t)) * coeff).astype(o_ref.dtype)


@functools.partial(jax.jit, static_argnames=("block_m", "out_dtype"))
def rd_encoder_forward(x, means_weight, stds_weight, *, block_m=4096, out_dtype=None):
    """Pallas implementation of RDEncoder.forward.

    Args:
      x: any-shaped array of resistance distances.
      means_weight: (1, H) embedding weight.
      stds_weight:  (1, H) embedding weight.
      block_m: rows of the packed view per grid step (rounded to a multiple of 128).
      out_dtype: optional override (e.g. jnp.bfloat16 to halve store traffic);
                 defaults to means_weight.dtype (module semantics).
    Returns:
      (N, H) array where N = x.size.
    """
    hidden = means_weight.shape[-1]
    if out_dtype is None:
        out_dtype = means_weight.dtype

    # Pack several logical output rows into one 128-lane physical row when possible.
    lane = 128
    pack = lane // hidden if (hidden < lane and lane % hidden == 0) else 1
    width = pack * hidden

    # ---- parameter-side math hoisted out of the kernel (runs once, tiny) ----
    mean = jnp.reshape(means_weight, (-1,)).astype(jnp.float32)
    std = jnp.abs(jnp.reshape(stds_weight, (-1,)).astype(jnp.float32)) + 0.01
    inv_std = 1.0 / std
    pi = 3.14159                                  # matches the torch.jit.script constant
    coeff = inv_std / ((2.0 * pi) ** 0.5)
    s = inv_std * (0.5 ** 0.5)                    # fold the -0.5 into the scale

    params = jnp.stack(
        [jnp.tile(mean, pack), jnp.tile(s, pack), jnp.tile(coeff, pack)], axis=0
    )                                             # (3, width), one resident block

    # 0/1 selector that expands (pack,) -> (width,) on the MXU.
    sel = (
        jnp.arange(width, dtype=jnp.int32)[None, :] // hidden
        == jnp.arange(pack, dtype=jnp.int32)[:, None]
    ).astype(jnp.float32)                         # (pack, width)

    # ---- pack x (pad only to a multiple of `pack`) ----
    x_flat = jnp.reshape(x, (-1,)).astype(jnp.float32)
    n = x_flat.shape[0]
    n_rows = _cdiv(n, pack)
    padded_n = n_rows * pack
    if padded_n != n:
        x_flat = jnp.pad(x_flat, (0, padded_n - n))
    # Lane-dense packed layout: column r holds x_flat[r*pack : (r+1)*pack].
    x_packed = x_flat.reshape(n_rows, pack).T     # (pack, n_rows)

    # ---- tile size: multiple of 128, >= ~4 grid steps for mid/large N ----
    block_m = _round_up(max(block_m, 128), 128)
    bm = min(block_m, _round_up(_cdiv(n_rows, 4), 128))
    if bm >= n_rows:
        bm = n_rows                               # single exact block (full-dim escape hatch)
    grid = (_cdiv(n_rows, bm),)

    out_bytes = jnp.dtype(out_dtype).itemsize
    cost = pl.CostEstimate(
        flops=(2 * pack + 4) * n_rows * width,
        transcendentals=n_rows * width,
        bytes_accessed=4 * padded_n + 4 * (pack + 3) * width + out_bytes * n_rows * width,
    )

    out = pl.pallas_call(
        _rd_encoder_kernel,
        out_shape=jax.ShapeDtypeStruct((n_rows, width), out_dtype),
        grid=grid,
        in_specs=[
            pl.BlockSpec((pack, bm), lambda i: (0, i)),      # packed x, lane-dense
            pl.BlockSpec((pack, width), lambda i: (0, 0)),   # selector   (resident)
            pl.BlockSpec((3, width), lambda i: (0, 0)),      # fused params (resident)
        ],
        out_specs=pl.BlockSpec((bm, width), lambda i: (i, 0)),
        compiler_params=pltpu.CompilerParams(
            dimension_semantics=("parallel",),
            vmem_limit_bytes=32 * 1024 * 1024,
        ),
        cost_estimate=cost,
    )(x_packed, sel, params)

    # Free row-major view back to (N_padded, H); slice only if pack-padding was added.
    out = out.reshape(n_rows * pack, hidden)
    if padded_n != n:
        out = out[:n]
    return out


def _reference(x, means_weight, stds_weight):
    """Pure-JAX reference mirroring the PyTorch forward."""
    xf = jnp.reshape(x, (-1, 1)).astype(jnp.float32)
    mean = jnp.reshape(means_weight, (-1,)).astype(jnp.float32)
    std = jnp.abs(jnp.reshape(stds_weight, (-1,)).astype(jnp.float32)) + 0.01
    pi = 3.14159
    a = (2 * pi) ** 0.5
    out = jnp.exp(-0.5 * ((xf - mean) / std) ** 2) / (a * std)
    return out.astype(means_weight.dtype)


if __name__ == "__main__":
    hidden_channels = 32

    key = jax.random.PRNGKey(0)
    k_means, k_stds, k1, k2, k3 = jax.random.split(key, 5)

    # nn.init.uniform_(weight, 0, 3) for both Embedding(1, hidden) tables.
    means_weight = jax.random.uniform(
        k_means, (1, hidden_channels), jnp.float32, minval=0.0, maxval=3.0)
    stds_weight = jax.random.uniform(
        k_stds, (1, hidden_channels), jnp.float32, minval=0.0, maxval=3.0)

    def check(xx):
        out = jax.block_until_ready(rd_encoder_forward(xx, means_weight, stds_weight))
        ref = _reference(xx, means_weight, stds_weight)
        assert out.shape == (xx.size, hidden_channels), out.shape
        assert out.dtype == means_weight.dtype, out.dtype
        assert jnp.allclose(out, ref, atol=1e-5, rtol=1e-4), "mismatch vs reference"

    # Resistance-distance matrix for a small "graph": (num_nodes, num_nodes).
    check(jax.random.uniform(k1, (16, 16), jnp.float32, minval=0.0, maxval=5.0))   # N%pack==0, single block
    check(jax.random.uniform(k2, (7, 9), jnp.float32, minval=0.0, maxval=5.0))     # pack padding + slice path
    check(jax.random.uniform(k3, (41, 41), jnp.float32, minval=0.0, maxval=5.0))   # multi-step grid, ragged final block

    print("KERNEL_OK")
</pallas_src>

<mosaic_0001>
module attributes {stable_mosaic.version = 11 : i64} {
  func.func @_rd_encoder_kernel(%arg0: i32, %arg1: memref<4x64xf32, #tpu.memory_space<vmem>>, %arg2: memref<4x128xf32, #tpu.memory_space<vmem>>, %arg3: memref<3x128xf32, #tpu.memory_space<vmem>>, %arg4: memref<64x128xf32, #tpu.memory_space<vmem>>) attributes {dimension_semantics = [#tpu.dimension_semantics<parallel>], iteration_bounds = array<i64: 1>, scalar_prefetch = 0 : i64, scratch_operands = 0 : i64, tpu.core_type = #tpu.core_type<tc>, window_params = [{transform_indices = @transform_0, window_bounds = array<i64: 4, 64>}, {pipeline_mode = #tpu.pipeline_mode<synchronous>, transform_indices = @transform_1, window_bounds = array<i64: 4, 128>}, {pipeline_mode = #tpu.pipeline_mode<synchronous>, transform_indices = @transform_2, window_bounds = array<i64: 3, 128>}, {transform_indices = @transform_3, window_bounds = array<i64: 64, 128>}]} {
    %c0 = arith.constant 0 : index
    %c0_0 = arith.constant 0 : index
    %0 = vector.load %arg1[%c0, %c0_0] : memref<4x64xf32, #tpu.memory_space<vmem>>, vector<4x64xf32>
    %c0_1 = arith.constant 0 : index
    %c0_2 = arith.constant 0 : index
    %1 = vector.load %arg2[%c0_1, %c0_2] : memref<4x128xf32, #tpu.memory_space<vmem>>, vector<4x128xf32>
    %cst = arith.constant dense<0.000000e+00> : vector<64x128xf32>
    %2 = tpu.matmul %0, %1, %cst {dimension_numbers = #tpu.dot_dimension_numbers<[0], [0], [1], [1], [0, 1, 1, 1], [], []>, precision = #tpu.contract_precision<fp32>} : vector<4x64xf32>, vector<4x128xf32>, vector<64x128xf32> -> vector<64x128xf32>
    %c0_3 = arith.constant 0 : index
    %c0_4 = arith.constant 0 : index
    %3 = vector.load %arg3[%c0_3, %c0_4] : memref<3x128xf32, #tpu.memory_space<vmem>>, vector<1x128xf32>
    %c1 = arith.constant 1 : index
    %c0_5 = arith.constant 0 : index
    %4 = vector.load %arg3[%c1, %c0_5] : memref<3x128xf32, #tpu.memory_space<vmem>>, vector<1x128xf32>
    %c2 = arith.constant 2 : index
    %c0_6 = arith.constant 0 : index
    %5 = vector.load %arg3[%c2, %c0_6] : memref<3x128xf32, #tpu.memory_space<vmem>>, vector<1x128xf32>
    %6 = vector.broadcast %3 : vector<1x128xf32> to vector<64x128xf32>
    %7 = arith.subf %2, %6 : vector<64x128xf32>
    %8 = vector.broadcast %4 : vector<1x128xf32> to vector<64x128xf32>
    %9 = arith.mulf %7, %8 : vector<64x128xf32>
    %10 = arith.mulf %9, %9 : vector<64x128xf32>
    %cst_7 = arith.constant 0.000000e+00 : f32
    %11 = vector.broadcast %cst_7 : f32 to vector<64x128xf32>
    %12 = arith.subf %11, %10 : vector<64x128xf32>
    %13 = math.exp %12 : vector<64x128xf32>
    %14 = vector.broadcast %5 : vector<1x128xf32> to vector<64x128xf32>
    %15 = arith.mulf %13, %14 : vector<64x128xf32>
    %c0_8 = arith.constant 0 : index
    %c0_9 = arith.constant 0 : index
    %16 = vector.load %arg4[%c0_8, %c0_9] : memref<64x128xf32, #tpu.memory_space<vmem>>, vector<64x128xf32>
    tpu.vector_store %arg4[%c0_8, %c0_9], %15 {strides = array<i32>} : memref<64x128xf32, #tpu.memory_space<vmem>>, vector<64x128xf32>,
    return
  }
  func.func @transform_0(%arg0: i32) -> (i32, i32) {
    %c0_i32 = arith.constant 0 : i32
    %c0_i32_0 = arith.constant 0 : i32
    return %c0_i32, %arg0 : i32, i32
  }
  func.func @transform_1(%arg0: i32) -> (i32, i32) {
    %c0_i32 = arith.constant 0 : i32
    %c0_i32_0 = arith.constant 0 : i32
    %c0_i32_1 = arith.constant 0 : i32
    return %c0_i32, %c0_i32_0 : i32, i32
  }
  func.func @transform_2(%arg0: i32) -> (i32, i32) {
    %c0_i32 = arith.constant 0 : i32
    %c0_i32_0 = arith.constant 0 : i32
    %c0_i32_1 = arith.constant 0 : i32
    return %c0_i32, %c0_i32_0 : i32, i32
  }
  func.func @transform_3(%arg0: i32) -> (i32, i32) {
    %c0_i32 = arith.constant 0 : i32
    %c0_i32_0 = arith.constant 0 : i32
    return %arg0, %c0_i32 : i32, i32
  }
}

</mosaic_0001>

<llo_original>
// kernel: tile.24
$region0: #{tile.24}
  #allocation0 [shape = 's32[1]{0}', space=sflag, size = 0x4, scoped, tag = 'scoped memory for tile.24']
  %s0 = inlined_call_operand.vmem [shape: f32[32], index: 0, kind: input, shape index: {}]
  %s1 = inlined_call_operand.vmem [shape: f32[4,32], index: 1, kind: output, shape index: {}]
  // Predicated region
  $region2: #{tile.24} parent=0 // pred_check
    _
  $region3: #{tile.24} parent=0 // pred_check_branch
    %3 = sbr.rel (0) target = $region5
  $region4: #{tile.24} parent=0 // pred_region
    _
  $region5: #{tile.24} parent=0 // pred_fallthru
    _
  %v4 = vld [vmem:[%s0] ss:$0 sm:$0xff]
  %5 = vst [vmem:[%s1] sm:$0xf] %v4

// kernel: tile.27
$region0: #{tile.27}
  %s0 = inlined_call_operand.vmem [shape: f32[4,32], index: 0, kind: input, shape index: {}]
  %s1 = inlined_call_operand.vmem [shape: f32[1,128], index: 1, kind: output, shape index: {}]
  $region1: #{tile.27} parent=0
    #allocation0 [shape = 'u8[4096]{0}', space=vmem, size = 0x1000, scoped, tag = 'scoped mem for output reshape']
    #allocation1 [shape = 'u8[4096]{0}', space=vmem, size = 0x1000, scoped, tag = 'scoped mem for input reshape']
    %s3 = sshllo.u32 0, 4
    %v4 = vld [vmem:[%s0] sm:%s3]
    %5 = vst [vmem:[#allocation1] sm:%s3] %v4
    %v6 = vld [vmem:[#allocation1] sm:$0x1]
    %vm7 = vcmask 261120
    %8 = vst.msk [vmem:[#allocation0] sm:$0x1] %vm7, %v6
    %s9 = scalar_lea.vmem [#allocation1], 3
    %v10 = vld [vmem:[%s9] sm:$0x1]
    %11 = vrot.lane.b32.xlu0 %v10, 96
    %v12 = vpop.permute.xlu0 %11
    %vm13 = vcmask 1048320
    %14 = vst.msk [vmem:[#allocation0] sm:$0x1] %vm13, %v12
    %s15 = scalar_lea.vmem [#allocation1], 2
    %v16 = vld [vmem:[%s15] sm:$0x1]
    %17 = vrot.lane.b32.xlu0 %v16, 64
    %v18 = vpop.permute.xlu0 %17
    %vm19 = vcmask 785920
    %20 = vst.msk [vmem:[#allocation0] sm:$0x1] %vm19, %v18
    %s21 = scalar_lea.vmem [#allocation1], 1
    %v22 = vld [vmem:[%s21] sm:$0x1]
    %23 = vrot.lane.b32.xlu0 %v22, 32
    %v24 = vpop.permute.xlu0 %23
    %vm25 = vcmask 523520
    %26 = vst.msk [vmem:[#allocation0] sm:$0x1] %vm25, %v24
    %s28 = sshllo.u32 0, 1
    %v30 = vld [vmem:[#allocation0] sm:%s28]
    %s31 = sshllo.u32 0, 1
    %32 = vst [vmem:[%s1] sm:%s31] %v30

// kernel: rd_encoder_forward.1
$region0: #{rd_encoder_forward.1}
  #allocation0 [shape = 'u32[]', space=smem, size = 0x4, offset = 0x4, fixed_abs, tag = 'smem constant byte address 0x4 - core index']
  #allocation1 [shape = 'u32[144,128]{1,0:T(1,128)}', space=vmem, size = 0x12000, scoped, tag = 'internal scratch']
  %s0 = inlined_call_operand.vmem [shape: f32[4,64], index: 0, kind: input, shape index: {}]
  %s1 = inlined_call_operand.vmem [shape: f32[4,128], index: 1, kind: input, shape index: {}]
  %s2 = inlined_call_operand.vmem [shape: f32[3,128], index: 2, kind: input, shape index: {}]
  %s3 = inlined_call_operand.vmem [shape: f32[64,128], index: 3, kind: output, shape index: {}]
  %s4 = sld [smem:[#allocation0]]
  $region22: #{rd_encoder_forward.1} parent=0
    _
  %s6 = ssub.s32 1, %s4
  %s7 = scalar_select 0, %s6, %s4
  // Predicated region
  $region2: #{rd_encoder_forward.1} parent=0 // pred_check
    _
  $region3: #{rd_encoder_forward.1} parent=0 // pred_check_branch
    %9 = sbr.rel (0) target = $region5
  $region4: #{rd_encoder_forward.1} parent=0 // pred_region
    _
  $region5: #{rd_encoder_forward.1} parent=0 // pred_fallthru
    _
  // Predicated region
  $region6: #{rd_encoder_forward.1} parent=0 // pred_check
    _
  $region7: #{rd_encoder_forward.1} parent=0 // pred_check_branch
    %11 = sbr.rel (0) target = $region9
  $region8: #{rd_encoder_forward.1} parent=0 // pred_region
    _
  $region9: #{rd_encoder_forward.1} parent=0 // pred_fallthru
    _
  // Predicated region
  $region10: #{rd_encoder_forward.1} parent=0 // pred_check
    _
  $region11: #{rd_encoder_forward.1} parent=0 // pred_check_branch
    %13 = sbr.rel (0) target = $region13
  $region12: #{rd_encoder_forward.1} parent=0 // pred_region
    _
  $region13: #{rd_encoder_forward.1} parent=0 // pred_fallthru
    _
  %v14 = vld [vmem:[%s0] sm:$0xf]
  %v15 = vld [vmem:[%s1] sm:$0xf]
  %16 = vxpose.xlu0.b32.start [1/16] %v14, 128
  %17 = vxpose.xlu0.b32.cont [2/16] 0.0, 128
  %18 = vxpose.xlu0.b32.cont [3/16] 0.0, 128
  %19 = vxpose.xlu0.b32.cont [4/16] 0.0, 128
  %20 = vxpose.xlu0.b32.cont [5/16] 0.0, 128
  %21 = vxpose.xlu0.b32.cont [6/16] 0.0, 128
  %22 = vxpose.xlu0.b32.cont [7/16] 0.0, 128
  %23 = vxpose.xlu0.b32.cont [8/16] 0.0, 128
  %24 = vxpose.xlu0.b32.cont [9/16] 0.0, 128
  %25 = vxpose.xlu0.b32.cont [10/16] 0.0, 128
  %26 = vxpose.xlu0.b32.cont [11/16] 0.0, 128
  %27 = vxpose.xlu0.b32.cont [12/16] 0.0, 128
  %28 = vxpose.xlu0.b32.cont [13/16] 0.0, 128
  %29 = vxpose.xlu0.b32.cont [14/16] 0.0, 128
  %30 = vxpose.xlu0.b32.cont [15/16] 0.0, 128
  %31 = vxpose.xlu0.b32.end [16/16] 0.0, 128
  %v32 = vpop.trf.xlu0
  %v33 = vpop.trf.xlu0
  %v34 = vpop.trf.xlu0
  %v35 = vpop.trf.xlu0
  %v36 = vpop.trf.xlu0
  %v37 = vpop.trf.xlu0
  %v38 = vpop.trf.xlu0
  %v39 = vpop.trf.xlu0
  %v40 = vpop.trf.xlu0
  %v41 = vpop.trf.xlu0
  %v42 = vpop.trf.xlu0
  %v43 = vpop.trf.xlu0
  %v44 = vpop.trf.xlu0
  %v45 = vpop.trf.xlu0
  %v46 = vpop.trf.xlu0
  %v47 = vpop.trf.xlu0
  %vm48 = vcmask 31744
  %v50 = vsel %vm48, %v32, 0
  %v53 = vsel %vm48, %v33, 0
  %v56 = vsel %vm48, %v34, 0
  %v59 = vsel %vm48, %v35, 0
  %v62 = vsel %vm48, %v36, 0
  %v65 = vsel %vm48, %v37, 0
  %v68 = vsel %vm48, %v38, 0
  %v71 = vsel %vm48, %v39, 0
  %vm73 = vcmask 1043456
  %v75 = vsel %vm73, %v15, 0
  %77 = vmatprep.subr.mxu0 0.0
  %v78 = vand.u32 %v75, 4294901760
  %79 = vmatpush1.msra.mxu0 %v78
  %80 = vmatprep.subr.mxu0 0.0
  %81 = vmatpush1.msra.mxu0 0.0
  %82 = vmatprep.subr.mxu0 0.0
  %83 = vmatpush1.msra.mxu0 0.0
  %84 = vmatprep.subr.mxu0 0.0
  %85 = vmatpush1.msra.mxu0 0.0
  %86 = vmatprep.subr.mxu0 0.0
  %87 = vmatpush1.msra.mxu0 0.0
  %88 = vmatprep.subr.mxu0 0.0
  %89 = vmatpush1.msra.mxu0 0.0
  %90 = vmatprep.subr.mxu0 0.0
  %91 = vmatpush1.msra.mxu0 0.0
  %92 = vmatprep.subr.mxu0 0.0
  %93 = vmatpush1.msra.mxu0 0.0
  %94 = vmatprep.subr.mxu0 0.0
  %95 = vmatpush1.msra.mxu0 0.0
  %96 = vmatprep.subr.mxu0 0.0
  %97 = vmatpush1.msra.mxu0 0.0
  %98 = vmatprep.subr.mxu0 0.0
  %99 = vmatpush1.msra.mxu0 0.0
  %100 = vmatprep.subr.mxu0 0.0
  %101 = vmatpush1.msra.mxu0 0.0
  %102 = vmatprep.subr.mxu0 0.0
  %103 = vmatpush1.msra.mxu0 0.0
  %104 = vmatprep.subr.mxu0 0.0
  %105 = vmatpush1.msra.mxu0 0.0
  %106 = vmatprep.subr.mxu0 0.0
  %107 = vmatpush1.msra.mxu0 0.0
  %108 = vmatprep.subr.mxu0 0.0
  %109 = vmatpush1.msra.mxu0 0.0
  %110 = vmatprep.subr.mxu0 0.0
  %111 = vmatpush1.msra.mxu0 0.0
  %112 = vmatprep.subr.mxu0 0.0
  %113 = vmatpush1.msra.mxu0 0.0
  %114 = vmatprep.subr.mxu0 0.0
  %115 = vmatpush1.msra.mxu0 0.0
  %116 = vmatprep.subr.mxu0 0.0
  %117 = vmatpush1.msra.mxu0 0.0
  %118 = vmatprep.subr.mxu0 0.0
  %119 = vmatpush1.msra.mxu0 0.0
  %120 = vmatprep.subr.mxu0 0.0
  %121 = vmatpush1.msra.mxu0 0.0
  %122 = vmatprep.subr.mxu0 0.0
  %123 = vmatpush1.msra.mxu0 0.0
  %124 = vmatprep.subr.mxu0 0.0
  %125 = vmatpush1.msra.mxu0 0.0
  %126 = vmatprep.subr.mxu0 0.0
  %127 = vmatpush1.msra.mxu0 0.0
  %128 = vmatprep.subr.mxu0 0.0
  %129 = vmatpush1.msra.mxu0 0.0
  %130 = vmatprep.subr.mxu0 0.0
  %131 = vmatpush1.msra.mxu0 0.0
  %132 = vmatprep.subr.mxu0 0.0
  %133 = vmatpush1.msra.mxu0 0.0
  %134 = vmatprep.subr.mxu0 0.0
  %135 = vmatpush1.msra.mxu0 0.0
  %136 = vmatprep.subr.mxu0 0.0
  %137 = vmatpush1.msra.mxu0 0.0
  %138 = vmatprep.subr.mxu0 0.0
  %139 = vmatpush1.msra.mxu0 0.0
  %140 = vmatprep.subr.mxu0 0.0
  %141 = vmatpush1.msra.mxu0 0.0
  %142 = vmatprep.mubr.f32.mxu0 0.0
  %v143 = vand.u32 %v50, 4294901760
  %v144 = vsub.f32 %v50, %v143
  %v145 = vand.u32 %v144, 4294901760
  %v146 = vsub.f32 %v144, %v145
  %v147 = vand.u32 %v146, 4294901760
  %148 = vmatmul.mubr.f32.gmra.mrb[0].mxu0 %v147
  %v149 = vpop.f32.mrb[0].mxu0
  %v150 = vadd.f32 0.0, %v149
  %v151 = vpop.f32.mrb[0].mxu0
  %152 = vmatprep.mubr.f32.mxu0 0.0
  %v153 = vand.u32 %v53, 4294901760
  %v154 = vsub.f32 %v53, %v153
  %v155 = vand.u32 %v154, 4294901760
  %v156 = vsub.f32 %v154, %v155
  %v157 = vand.u32 %v156, 4294901760
  %158 = vmatmul.mubr.f32.gmra.mrb[0].mxu0 %v157
  %v159 = vpop.f32.mrb[0].mxu0
  %v160 = vadd.f32 0.0, %v159
  %v161 = vpop.f32.mrb[0].mxu0
  %162 = vmatprep.mubr.f32.mxu0 0.0
  %v163 = vand.u32 %v56, 4294901760
  %v164 = vsub.f32 %v56, %v163
  %v165 = vand.u32 %v164, 4294901760
  %v166 = vsub.f32 %v164, %v165
  %v167 = vand.u32 %v166, 4294901760
  %168 = vmatmul.mubr.f32.gmra.mrb[0].mxu0 %v167
  %v169 = vpop.f32.mrb[0].mxu0
  %v170 = vadd.f32 0.0, %v169
  %v171 = vpop.f32.mrb[0].mxu0
  %172 = vmatprep.mubr.f32.mxu0 0.0
  %v173 = vand.u32 %v59, 4294901760
  %v174 = vsub.f32 %v59, %v173
  %v175 = vand.u32 %v174, 4294901760
  %v176 = vsub.f32 %v174, %v175
  %v177 = vand.u32 %v176, 4294901760
  %178 = vmatmul.mubr.f32.gmra.mrb[0].mxu0 %v177
  %v179 = vpop.f32.mrb[0].mxu0
  %v180 = vadd.f32 0.0, %v179
  %v181 = vpop.f32.mrb[0].mxu0
  %182 = vmatprep.mubr.f32.mxu0 0.0
  %v183 = vand.u32 %v62, 4294901760
  %v184 = vsub.f32 %v62, %v183
  %v185 = vand.u32 %v184, 4294901760
  %v186 = vsub.f32 %v184, %v185
  %v187 = vand.u32 %v186, 4294901760
  %188 = vmatmul.mubr.f32.gmra.mrb[0].mxu0 %v187
  %v189 = vpop.f32.mrb[0].mxu0
  %v190 = vadd.f32 0.0, %v189
  %v191 = vpop.f32.mrb[0].mxu0
  %192 = vmatprep.mubr.f32.mxu0 0.0
  %v193 = vand.u32 %v65, 4294901760
  %v194 = vsub.f32 %v65, %v193
  %v195 = vand.u32 %v194, 4294901760
  %v196 = vsub.f32 %v194, %v195
  %v197 = vand.u32 %v196, 4294901760
  %198 = vmatmul.mubr.f32.gmra.mrb[0].mxu0 %v197
  %v199 = vpop.f32.mrb[0].mxu0
  %v200 = vadd.f32 0.0, %v199
  %v201 = vpop.f32.mrb[0].mxu0
  %202 = vmatprep.mubr.f32.mxu0 0.0
  %v203 = vand.u32 %v68, 4294901760
  %v204 = vsub.f32 %v68, %v203
  %v205 = vand.u32 %v204, 4294901760
  %v206 = vsub.f32 %v204, %v205
  %v207 = vand.u32 %v206, 4294901760
  %208 = vmatmul.mubr.f32.gmra.mrb[0].mxu0 %v207
  %v209 = vpop.f32.mrb[0].mxu0
  %v210 = vadd.f32 0.0, %v209
  %v211 = vpop.f32.mrb[0].mxu0
  %212 = vmatprep.mubr.f32.mxu0 0.0
  %v213 = vand.u32 %v71, 4294901760
  %v214 = vsub.f32 %v71, %v213
  %v215 = vand.u32 %v214, 4294901760
  %v216 = vsub.f32 %v214, %v215
  %v217 = vand.u32 %v216, 4294901760
  %218 = vmatmul.mubr.f32.gmra.mrb[0].mxu0 %v217
  %v219 = vpop.f32.mrb[0].mxu0
  %v220 = vadd.f32 0.0, %v219
  %v221 = vpop.f32.mrb[0].mxu0
  %222 = vdwg.mxu0
  %223 = vmatprep.subr.mxu0 0.0
  %v224 = vand.u32 %v75, 4294901760
  %v225 = vsub.f32 %v75, %v224
  %v226 = vand.u32 %v225, 4294901760
  %v227 = vsub.f32 %v225, %v226
  %v228 = vand.u32 %v227, 4294901760
  %229 = vmatpush1.msra.mxu0 %v228
  %230 = vmatprep.subr.mxu0 0.0
  %231 = vmatpush1.msra.mxu0 0.0
  %232 = vmatprep.subr.mxu0 0.0
  %233 = vmatpush1.msra.mxu0 0.0
  %234 = vmatprep.subr.mxu0 0.0
  %235 = vmatpush1.msra.mxu0 0.0
  %236 = vmatprep.subr.mxu0 0.0
  %237 = vmatpush1.msra.mxu0 0.0
  %238 = vmatprep.subr.mxu0 0.0
  %239 = vmatpush1.msra.mxu0 0.0
  %240 = vmatprep.subr.mxu0 0.0
  %241 = vmatpush1.msra.mxu0 0.0
  %242 = vmatprep.subr.mxu0 0.0
  %243 = vmatpush1.msra.mxu0 0.0
  %244 = vmatprep.subr.mxu0 0.0
  %245 = vmatpush1.msra.mxu0 0.0
  %246 = vmatprep.subr.mxu0 0.0
  %247 = vmatpush1.msra.mxu0 0.0
  %248 = vmatprep.subr.mxu0 0.0
  %249 = vmatpush1.msra.mxu0 0.0
  %250 = vmatprep.subr.mxu0 0.0
  %251 = vmatpush1.msra.mxu0 0.0
  %252 = vmatprep.subr.mxu0 0.0
  %253 = vmatpush1.msra.mxu0 0.0
  %254 = vmatprep.subr.mxu0 0.0
  %255 = vmatpush1.msra.mxu0 0.0
  %256 = vmatprep.subr.mxu0 0.0
  %257 = vmatpush1.msra.mxu0 0.0
  %258 = vmatprep.subr.mxu0 0.0
  %259 = vmatpush1.msra.mxu0 0.0
  %260 = vmatprep.subr.mxu0 0.0
  %261 = vmatpush1.msra.mxu0 0.0
  %262 = vmatprep.subr.mxu0 0.0
  %263 = vmatpush1.msra.mxu0 0.0
  %264 = vmatprep.subr.mxu0 0.0
  %265 = vmatpush1.msra.mxu0 0.0
  %266 = vmatprep.subr.mxu0 0.0
  %267 = vmatpush1.msra.mxu0 0.0
  %268 = vmatprep.subr.mxu0 0.0
  %269 = vmatpush1.msra.mxu0 0.0
  %270 = vmatprep.subr.mxu0 0.0
  %271 = vmatpush1.msra.mxu0 0.0
  %272 = vmatprep.subr.mxu0 0.0
  %273 = vmatpush1.msra.mxu0 0.0
  %274 = vmatprep.subr.mxu0 0.0
  %275 = vmatpush1.msra.mxu0 0.0
  %276 = vmatprep.subr.mxu0 0.0
  %277 = vmatpush1.msra.mxu0 0.0
  %278 = vmatprep.subr.mxu0 0.0
  %279 = vmatpush1.msra.mxu0 0.0
  %280 = vmatprep.subr.mxu0 0.0
  %281 = vmatpush1.msra.mxu0 0.0
  %282 = vmatprep.subr.mxu0 0.0
  %283 = vmatpush1.msra.mxu0 0.0
  %284 = vmatprep.subr.mxu0 0.0
  %285 = vmatpush1.msra.mxu0 0.0
  %286 = vmatprep.subr.mxu0 0.0
  %287 = vmatpush1.msra.mxu0 0.0
  %288 = vmatprep.subr.mxu0 0.0
  %289 = vmatpush1.msra.mxu0 0.0
  %290 = vmatprep.subr.mxu0 0.0
  %291 = vmatpush1.msra.mxu0 0.0
  %292 = vmatprep.mubr.f32.mxu0 0.0
  %v293 = vand.u32 %v50, 4294901760
  %294 = vmatmul.mubr.f32.gmra.mrb[0].mxu0 %v293
  %v295 = vpop.f32.mrb[0].mxu0
  %v296 = vadd.f32 %v150, %v295
  %v297 = vpop.f32.mrb[0].mxu0
  %298 = vmatprep.mubr.f32.mxu0 0.0
  %v299 = vand.u32 %v53, 4294901760
  %300 = vmatmul.mubr.f32.gmra.mrb[0].mxu0 %v299
  %v301 = vpop.f32.mrb[0].mxu0
  %v302 = vadd.f32 %v160, %v301
  %v303 = vpop.f32.mrb[0].mxu0
  %304 = vmatprep.mubr.f32.mxu0 0.0
  %v305 = vand.u32 %v56, 4294901760
  %306 = vmatmul.mubr.f32.gmra.mrb[0].mxu0 %v305
  %v307 = vpop.f32.mrb[0].mxu0
  %v308 = vadd.f32 %v170, %v307
  %v309 = vpop.f32.mrb[0].mxu0
  %310 = vmatprep.mubr.f32.mxu0 0.0
  %v311 = vand.u32 %v59, 4294901760
  %312 = vmatmul.mubr.f32.gmra.mrb[0].mxu0 %v311
  %v313 = vpop.f32.mrb[0].mxu0
  %v314 = vadd.f32 %v180, %v313
  %v315 = vpop.f32.mrb[0].mxu0
  %316 = vmatprep.mubr.f32.mxu0 0.0
  %v317 = vand.u32 %v62, 4294901760
  %318 = vmatmul.mubr.f32.gmra.mrb[0].mxu0 %v317
  %v319 = vpop.f32.mrb[0].mxu0
  %v320 = vadd.f32 %v190, %v319
  %v321 = vpop.f32.mrb[0].mxu0
  %322 = vmatprep.mubr.f32.mxu0 0.0
  %v323 = vand.u32 %v65, 4294901760
  %324 = vmatmul.mubr.f32.gmra.mrb[0].mxu0 %v323
  %v325 = vpop.f32.mrb[0].mxu0
  %v326 = vadd.f32 %v200, %v325
  %v327 = vpop.f32.mrb[0].mxu0
  %328 = vmatprep.mubr.f32.mxu0 0.0
  %v329 = vand.u32 %v68, 4294901760
  %330 = vmatmul.mubr.f32.gmra.mrb[0].mxu0 %v329
  %v331 = vpop.f32.mrb[0].mxu0
  %v332 = vadd.f32 %v210, %v331
  %v333 = vpop.f32.mrb[0].mxu0
  %334 = vmatprep.mubr.f32.mxu0 0.0
  %v335 = vand.u32 %v71, 4294901760
  %336 = vmatmul.mubr.f32.gmra.mrb[0].mxu0 %v335
  %v337 = vpop.f32.mrb[0].mxu0
  %v338 = vadd.f32 %v220, %v337
  %v339 = vpop.f32.mrb[0].mxu0
  %340 = vdwg.mxu0
  %341 = vmatprep.subr.mxu0 0.0
  %v342 = vand.u32 %v75, 4294901760
  %v343 = vsub.f32 %v75, %v342
  %344 = vmatpush1.msra.mxu0 %v343
  %345 = vmatprep.subr.mxu0 0.0
  %346 = vmatpush1.msra.mxu0 0.0
  %347 = vmatprep.subr.mxu0 0.0
  %348 = vmatpush1.msra.mxu0 0.0
  %349 = vmatprep.subr.mxu0 0.0
  %350 = vmatpush1.msra.mxu0 0.0
  %351 = vmatprep.subr.mxu0 0.0
  %352 = vmatpush1.msra.mxu0 0.0
  %353 = vmatprep.subr.mxu0 0.0
  %354 = vmatpush1.msra.mxu0 0.0
  %355 = vmatprep.subr.mxu0 0.0
  %356 = vmatpush1.msra.mxu0 0.0
  %357 = vmatprep.subr.mxu0 0.0
  %358 = vmatpush1.msra.mxu0 0.0
  %359 = vmatprep.subr.mxu0 0.0
  %360 = vmatpush1.msra.mxu0 0.0
  %361 = vmatprep.subr.mxu0 0.0
  %362 = vmatpush1.msra.mxu0 0.0
  %363 = vmatprep.subr.mxu0 0.0
  %364 = vmatpush1.msra.mxu0 0.0
  %365 = vmatprep.subr.mxu0 0.0
  %366 = vmatpush1.msra.mxu0 0.0
  %367 = vmatprep.subr.mxu0 0.0
  %368 = vmatpush1.msra.mxu0 0.0
  %369 = vmatprep.subr.mxu0 0.0
  %370 = vmatpush1.msra.mxu0 0.0
  %371 = vmatprep.subr.mxu0 0.0
  %372 = vmatpush1.msra.mxu0 0.0
  %373 = vmatprep.subr.mxu0 0.0
  %374 = vmatpush1.msra.mxu0 0.0
  %375 = vmatprep.subr.mxu0 0.0
  %376 = vmatpush1.msra.mxu0 0.0
  %377 = vmatprep.subr.mxu0 0.0
  %378 = vmatpush1.msra.mxu0 0.0
  %379 = vmatprep.subr.mxu0 0.0
  %380 = vmatpush1.msra.mxu0 0.0
  %381 = vmatprep.subr.mxu0 0.0
  %382 = vmatpush1.msra.mxu0 0.0
  %383 = vmatprep.subr.mxu0 0.0
  %384 = vmatpush1.msra.mxu0 0.0
  %385 = vmatprep.subr.mxu0 0.0
  %386 = vmatpush1.msra.mxu0 0.0
  %387 = vmatprep.subr.mxu0 0.0
  %388 = vmatpush1.msra.mxu0 0.0
  %389 = vmatprep.subr.mxu0 0.0
  %390 = vmatpush1.msra.mxu0 0.0
  %391 = vmatprep.subr.mxu0 0.0
  %392 = vmatpush1.msra.mxu0 0.0
  %393 = vmatprep.subr.mxu0 0.0
  %394 = vmatpush1.msra.mxu0 0.0
  %395 = vmatprep.subr.mxu0 0.0
  %396 = vmatpush1.msra.mxu0 0.0
  %397 = vmatprep.subr.mxu0 0.0
  %398 = vmatpush1.msra.mxu0 0.0
  %399 = vmatprep.subr.mxu0 0.0
  %400 = vmatpush1.msra.mxu0 0.0
  %401 = vmatprep.subr.mxu0 0.0
  %402 = vmatpush1.msra.mxu0 0.0
  %403 = vmatprep.subr.mxu0 0.0
  %404 = vmatpush1.msra.mxu0 0.0
  %405 = vmatprep.subr.mxu0 0.0
  %406 = vmatpush1.msra.mxu0 0.0
  %407 = vmatprep.mubr.f32.mxu0 0.0
  %v408 = vand.u32 %v50, 4294901760
  %v409 = vsub.f32 %v50, %v408
  %410 = vmatmul.mubr.f32.gmra.mrb[0].mxu0 %v409
  %v411 = vpop.f32.mrb[0].mxu0
  %v412 = vadd.f32 %v296, %v411
  %v413 = vpop.f32.mrb[0].mxu0
  %414 = vmatprep.mubr.f32.mxu0 0.0
  %v415 = vand.u32 %v53, 4294901760
  %v416 = vsub.f32 %v53, %v415
  %417 = vmatmul.mubr.f32.gmra.mrb[0].mxu0 %v416
  %v418 = vpop.f32.mrb[0].mxu0
  %v419 = vadd.f32 %v302, %v418
  %v420 = vpop.f32.mrb[0].mxu0
  %421 = vmatprep.mubr.f32.mxu0 0.0
  %v422 = vand.u32 %v56, 4294901760
  %v423 = vsub.f32 %v56, %v422
  %424 = vmatmul.mubr.f32.gmra.mrb[0].mxu0 %v423
  %v425 = vpop.f32.mrb[0].mxu0
  %v426 = vadd.f32 %v308, %v425
  %v427 = vpop.f32.mrb[0].mxu0
  %428 = vmatprep.mubr.f32.mxu0 0.0
  %v429 = vand.u32 %v59, 4294901760
  %v430 = vsub.f32 %v59, %v429
  %431 = vmatmul.mubr.f32.gmra.mrb[0].mxu0 %v430
  %v432 = vpop.f32.mrb[0].mxu0
  %v433 = vadd.f32 %v314, %v432
  %v434 = vpop.f32.mrb[0].mxu0
  %435 = vmatprep.mubr.f32.mxu0 0.0
  %v436 = vand.u32 %v62, 4294901760
  %v437 = vsub.f32 %v62, %v436
  %438 = vmatmul.mubr.f32.gmra.mrb[0].mxu0 %v437
  %v439 = vpop.f32.mrb[0].mxu0
  %v440 = vadd.f32 %v320, %v439
  %v441 = vpop.f32.mrb[0].mxu0
  %442 = vmatprep.mubr.f32.mxu0 0.0
  %v443 = vand.u32 %v65, 4294901760
  %v444 = vsub.f32 %v65, %v443
  %445 = vmatmul.mubr.f32.gmra.mrb[0].mxu0 %v444
  %v446 = vpop.f32.mrb[0].mxu0
  %v447 = vadd.f32 %v326, %v446
  %v448 = vpop.f32.mrb[0].mxu0
  %449 = vmatprep.mubr.f32.mxu0 0.0
  %v450 = vand.u32 %v68, 4294901760
  %v451 = vsub.f32 %v68, %v450
  %452 = vmatmul.mubr.f32.gmra.mrb[0].mxu0 %v451
  %v453 = vpop.f32.mrb[0].mxu0
  %v454 = vadd.f32 %v332, %v453
  %v455 = vpop.f32.mrb[0].mxu0
  %456 = vmatprep.mubr.f32.mxu0 0.0
  %v457 = vand.u32 %v71, 4294901760
  %v458 = vsub.f32 %v71, %v457
  %459 = vmatmul.mubr.f32.gmra.mrb[0].mxu0 %v458
  %v460 = vpop.f32.mrb[0].mxu0
  %v461 = vadd.f32 %v338, %v460
  %v462 = vpop.f32.mrb[0].mxu0
  %463 = vdwg.mxu0
  %464 = vmatprep.subr.mxu0 0.0
  %v465 = vand.u32 %v75, 4294901760
  %466 = vmatpush1.msra.mxu0 %v465
  %467 = vmatprep.subr.mxu0 0.0
  %468 = vmatpush1.msra.mxu0 0.0
  %469 = vmatprep.subr.mxu0 0.0
  %470 = vmatpush1.msra.mxu0 0.0
  %471 = vmatprep.subr.mxu0 0.0
  %472 = vmatpush1.msra.mxu0 0.0
  %473 = vmatprep.subr.mxu0 0.0
  %474 = vmatpush1.msra.mxu0 0.0
  %475 = vmatprep.subr.mxu0 0.0
  %476 = vmatpush1.msra.mxu0 0.0
  %477 = vmatprep.subr.mxu0 0.0
  %478 = vmatpush1.msra.mxu0 0.0
  %479 = vmatprep.subr.mxu0 0.0
  %480 = vmatpush1.msra.mxu0 0.0
  %481 = vmatprep.subr.mxu0 0.0
  %482 = vmatpush1.msra.mxu0 0.0
  %483 = vmatprep.subr.mxu0 0.0
  %484 = vmatpush1.msra.mxu0 0.0
  %485 = vmatprep.subr.mxu0 0.0
  %486 = vmatpush1.msra.mxu0 0.0
  %487 = vmatprep.subr.mxu0 0.0
  %488 = vmatpush1.msra.mxu0 0.0
  %489 = vmatprep.subr.mxu0 0.0
  %490 = vmatpush1.msra.mxu0 0.0
  %491 = vmatprep.subr.mxu0 0.0
  %492 = vmatpush1.msra.mxu0 0.0
  %493 = vmatprep.subr.mxu0 0.0
  %494 = vmatpush1.msra.mxu0 0.0
  %495 = vmatprep.subr.mxu0 0.0
  %496 = vmatpush1.msra.mxu0 0.0
  %497 = vmatprep.subr.mxu0 0.0
  %498 = vmatpush1.msra.mxu0 0.0
  %499 = vmatprep.subr.mxu0 0.0
  %500 = vmatpush1.msra.mxu0 0.0
  %501 = vmatprep.subr.mxu0 0.0
  %502 = vmatpush1.msra.mxu0 0.0
  %503 = vmatprep.subr.mxu0 0.0
  %504 = vmatpush1.msra.mxu0 0.0
  %505 = vmatprep.subr.mxu0 0.0
  %506 = vmatpush1.msra.mxu0 0.0
  %507 = vmatprep.subr.mxu0 0.0
  %508 = vmatpush1.msra.mxu0 0.0
  %509 = vmatprep.subr.mxu0 0.0
  %510 = vmatpush1.msra.mxu0 0.0
  %511 = vmatprep.subr.mxu0 0.0
  %512 = vmatpush1.msra.mxu0 0.0
  %513 = vmatprep.subr.mxu0 0.0
  %514 = vmatpush1.msra.mxu0 0.0
  %515 = vmatprep.subr.mxu0 0.0
  %516 = vmatpush1.msra.mxu0 0.0
  %517 = vmatprep.subr.mxu0 0.0
  %518 = vmatpush1.msra.mxu0 0.0
  %519 = vmatprep.subr.mxu0 0.0
  %520 = vmatpush1.msra.mxu0 0.0
  %521 = vmatprep.subr.mxu0 0.0
  %522 = vmatpush1.msra.mxu0 0.0
  %523 = vmatprep.subr.mxu0 0.0
  %524 = vmatpush1.msra.mxu0 0.0
  %525 = vmatprep.subr.mxu0 0.0
  %526 = vmatpush1.msra.mxu0 0.0
  %527 = vmatprep.subr.mxu0 0.0
  %528 = vmatpush1.msra.mxu0 0.0
  %529 = vmatprep.mubr.f32.mxu0 0.0
  %v530 = vand.u32 %v50, 4294901760
  %v531 = vsub.f32 %v50, %v530
  %v532 = vand.u32 %v531, 4294901760
  %533 = vmatmul.mubr.f32.gmra.mrb[0].mxu0 %v532
  %v534 = vpop.f32.mrb[0].mxu0
  %v535 = vadd.f32 %v412, %v534
  %v536 = vpop.f32.mrb[0].mxu0
  %537 = vmatprep.mubr.f32.mxu0 0.0
  %v538 = vand.u32 %v53, 4294901760
  %v539 = vsub.f32 %v53, %v538
  %v540 = vand.u32 %v539, 4294901760
  %541 = vmatmul.mubr.f32.gmra.mrb[0].mxu0 %v540
  %v542 = vpop.f32.mrb[0].mxu0
  %v543 = vadd.f32 %v419, %v542
  %v544 = vpop.f32.mrb[0].mxu0
  %545 = vmatprep.mubr.f32.mxu0 0.0
  %v546 = vand.u32 %v56, 4294901760
  %v547 = vsub.f32 %v56, %v546
  %v548 = vand.u32 %v547, 4294901760
  %549 = vmatmul.mubr.f32.gmra.mrb[0].mxu0 %v548
  %v550 = vpop.f32.mrb[0].mxu0
  %v551 = vadd.f32 %v426, %v550
  %v552 = vpop.f32.mrb[0].mxu0
  %553 = vmatprep.mubr.f32.mxu0 0.0
  %v554 = vand.u32 %v59, 4294901760
  %v555 = vsub.f32 %v59, %v554
  %v556 = vand.u32 %v555, 4294901760
  %557 = vmatmul.mubr.f32.gmra.mrb[0].mxu0 %v556
  %v558 = vpop.f32.mrb[0].mxu0
  %v559 = vadd.f32 %v433, %v558
  %v560 = vpop.f32.mrb[0].mxu0
  %561 = vmatprep.mubr.f32.mxu0 0.0
  %v562 = vand.u32 %v62, 4294901760
  %v563 = vsub.f32 %v62, %v562
  %v564 = vand.u32 %v563, 4294901760
  %565 = vmatmul.mubr.f32.gmra.mrb[0].mxu0 %v564
  %v566 = vpop.f32.mrb[0].mxu0
  %v567 = vadd.f32 %v440, %v566
  %v568 = vpop.f32.mrb[0].mxu0
  %569 = vmatprep.mubr.f32.mxu0 0.0
  %v570 = vand.u32 %v65, 4294901760
  %v571 = vsub.f32 %v65, %v570
  %v572 = vand.u32 %v571, 4294901760
  %573 = vmatmul.mubr.f32.gmra.mrb[0].mxu0 %v572
  %v574 = vpop.f32.mrb[0].mxu0
  %v575 = vadd.f32 %v447, %v574
  %v576 = vpop.f32.mrb[0].mxu0
  %577 = vmatprep.mubr.f32.mxu0 0.0
  %v578 = vand.u32 %v68, 4294901760
  %v579 = vsub.f32 %v68, %v578
  %v580 = vand.u32 %v579, 4294901760
  %581 = vmatmul.mubr.f32.gmra.mrb[0].mxu0 %v580
  %v582 = vpop.f32.mrb[0].mxu0
  %v583 = vadd.f32 %v454, %v582
  %v584 = vpop.f32.mrb[0].mxu0
  %585 = vmatprep.mubr.f32.mxu0 0.0
  %v586 = vand.u32 %v71, 4294901760
  %v587 = vsub.f32 %v71, %v586
  %v588 = vand.u32 %v587, 4294901760
  %589 = vmatmul.mubr.f32.gmra.mrb[0].mxu0 %v588
  %v590 = vpop.f32.mrb[0].mxu0
  %v591 = vadd.f32 %v461, %v590
  %v592 = vpop.f32.mrb[0].mxu0
  %593 = vdwg.mxu0
  %594 = vmatprep.subr.mxu0 0.0
  %v595 = vand.u32 %v75, 4294901760
  %v596 = vsub.f32 %v75, %v595
  %v597 = vand.u32 %v596, 4294901760
  %598 = vmatpush1.msra.mxu0 %v597
  %599 = vmatprep.subr.mxu0 0.0
  %600 = vmatpush1.msra.mxu0 0.0
  %601 = vmatprep.subr.mxu0 0.0
  %602 = vmatpush1.msra.mxu0 0.0
  %603 = vmatprep.subr.mxu0 0.0
  %604 = vmatpush1.msra.mxu0 0.0
  %605 = vmatprep.subr.mxu0 0.0
  %606 = vmatpush1.msra.mxu0 0.0
  %607 = vmatprep.subr.mxu0 0.0
  %608 = vmatpush1.msra.mxu0 0.0
  %609 = vmatprep.subr.mxu0 0.0
  %610 = vmatpush1.msra.mxu0 0.0
  %611 = vmatprep.subr.mxu0 0.0
  %612 = vmatpush1.msra.mxu0 0.0
  %613 = vmatprep.subr.mxu0 0.0
  %614 = vmatpush1.msra.mxu0 0.0
  %615 = vmatprep.subr.mxu0 0.0
  %616 = vmatpush1.msra.mxu0 0.0
  %617 = vmatprep.subr.mxu0 0.0
  %618 = vmatpush1.msra.mxu0 0.0
  %619 = vmatprep.subr.mxu0 0.0
  %620 = vmatpush1.msra.mxu0 0.0
  %621 = vmatprep.subr.mxu0 0.0
  %622 = vmatpush1.msra.mxu0 0.0
  %623 = vmatprep.subr.mxu0 0.0
  %624 = vmatpush1.msra.mxu0 0.0
  %625 = vmatprep.subr.mxu0 0.0
  %626 = vmatpush1.msra.mxu0 0.0
  %627 = vmatprep.subr.mxu0 0.0
  %628 = vmatpush1.msra.mxu0 0.0
  %629 = vmatprep.subr.mxu0 0.0
  %630 = vmatpush1.msra.mxu0 0.0
  %631 = vmatprep.subr.mxu0 0.0
  %632 = vmatpush1.msra.mxu0 0.0
  %633 = vmatprep.subr.mxu0 0.0
  %634 = vmatpush1.msra.mxu0 0.0
  %635 = vmatprep.subr.mxu0 0.0
  %636 = vmatpush1.msra.mxu0 0.0
  %637 = vmatprep.subr.mxu0 0.0
  %638 = vmatpush1.msra.mxu0 0.0
  %639 = vmatprep.subr.mxu0 0.0
  %640 = vmatpush1.msra.mxu0 0.0
  %641 = vmatprep.subr.mxu0 0.0
  %642 = vmatpush1.msra.mxu0 0.0
  %643 = vmatprep.subr.mxu0 0.0
  %644 = vmatpush1.msra.mxu0 0.0
  %645 = vmatprep.subr.mxu0 0.0
  %646 = vmatpush1.msra.mxu0 0.0
  %647 = vmatprep.subr.mxu0 0.0
  %648 = vmatpush1.msra.mxu0 0.0
  %649 = vmatprep.subr.mxu0 0.0
  %650 = vmatpush1.msra.mxu0 0.0
  %651 = vmatprep.subr.mxu0 0.0
  %652 = vmatpush1.msra.mxu0 0.0
  %653 = vmatprep.subr.mxu0 0.0
  %654 = vmatpush1.msra.mxu0 0.0
  %655 = vmatprep.subr.mxu0 0.0
  %656 = vmatpush1.msra.mxu0 0.0
  %657 = vmatprep.subr.mxu0 0.0
  %658 = vmatpush1.msra.mxu0 0.0
  %659 = vmatprep.subr.mxu0 0.0
  %660 = vmatpush1.msra.mxu0 0.0
  %661 = vmatprep.mubr.f32.mxu0 0.0
  %v662 = vand.u32 %v50, 4294901760
  %663 = vmatmul.mubr.f32.gmra.mrb[0].mxu0 %v662
  %v664 = vpop.f32.mrb[0].mxu0
  %v665 = vadd.f32 %v535, %v664
  %v666 = vpop.f32.mrb[0].mxu0
  %667 = vmatprep.mubr.f32.mxu0 0.0
  %v668 = vand.u32 %v53, 4294901760
  %669 = vmatmul.mubr.f32.gmra.mrb[0].mxu0 %v668
  %v670 = vpop.f32.mrb[0].mxu0
  %v671 = vadd.f32 %v543, %v670
  %v672 = vpop.f32.mrb[0].mxu0
  %673 = vmatprep.mubr.f32.mxu0 0.0
  %v674 = vand.u32 %v56, 4294901760
  %675 = vmatmul.mubr.f32.gmra.mrb[0].mxu0 %v674
  %v676 = vpop.f32.mrb[0].mxu0
  %v677 = vadd.f32 %v551, %v676
  %v678 = vpop.f32.mrb[0].mxu0
  %679 = vmatprep.mubr.f32.mxu0 0.0
  %v680 = vand.u32 %v59, 4294901760
  %681 = vmatmul.mubr.f32.gmra.mrb[0].mxu0 %v680
  %v682 = vpop.f32.mrb[0].mxu0
  %v683 = vadd.f32 %v559, %v682
  %v684 = vpop.f32.mrb[0].mxu0
  %685 = vmatprep.mubr.f32.mxu0 0.0
  %v686 = vand.u32 %v62, 4294901760
  %687 = vmatmul.mubr.f32.gmra.mrb[0].mxu0 %v686
  %v688 = vpop.f32.mrb[0].mxu0
  %v689 = vadd.f32 %v567, %v688
  %v690 = vpop.f32.mrb[0].mxu0
  %691 = vmatprep.mubr.f32.mxu0 0.0
  %v692 = vand.u32 %v65, 4294901760
  %693 = vmatmul.mubr.f32.gmra.mrb[0].mxu0 %v692
  %v694 = vpop.f32.mrb[0].mxu0
  %v695 = vadd.f32 %v575, %v694
  %v696 = vpop.f32.mrb[0].mxu0
  %697 = vmatprep.mubr.f32.mxu0 0.0
  %v698 = vand.u32 %v68, 4294901760
  %699 = vmatmul.mubr.f32.gmra.mrb[0].mxu0 %v698
  %v700 = vpop.f32.mrb[0].mxu0
  %v701 = vadd.f32 %v583, %v700
  %v702 = vpop.f32.mrb[0].mxu0
  %703 = vmatprep.mubr.f32.mxu0 0.0
  %v704 = vand.u32 %v71, 4294901760
  %705 = vmatmul.mubr.f32.gmra.mrb[0].mxu0 %v704
  %v706 = vpop.f32.mrb[0].mxu0
  %v707 = vadd.f32 %v591, %v706
  %v708 = vpop.f32.mrb[0].mxu0
  %709 = vdwg.mxu0
  %710 = vmatprep.subr.mxu0 0.0
  %v711 = vand.u32 %v75, 4294901760
  %712 = vmatpush1.msra.mxu0 %v711
  %713 = vmatprep.subr.mxu0 0.0
  %714 = vmatpush1.msra.mxu0 0.0
  %715 = vmatprep.subr.mxu0 0.0
  %716 = vmatpush1.msra.mxu0 0.0
  %717 = vmatprep.subr.mxu0 0.0
  %718 = vmatpush1.msra.mxu0 0.0
  %719 = vmatprep.subr.mxu0 0.0
  %720 = vmatpush1.msra.mxu0 0.0
  %721 = vmatprep.subr.mxu0 0.0
  %722 = vmatpush1.msra.mxu0 0.0
  %723 = vmatprep.subr.mxu0 0.0
  %724 = vmatpush1.msra.mxu0 0.0
  %725 = vmatprep.subr.mxu0 0.0
  %726 = vmatpush1.msra.mxu0 0.0
  %727 = vmatprep.subr.mxu0 0.0
  %728 = vmatpush1.msra.mxu0 0.0
  %729 = vmatprep.subr.mxu0 0.0
  %730 = vmatpush1.msra.mxu0 0.0
  %731 = vmatprep.subr.mxu0 0.0
  %732 = vmatpush1.msra.mxu0 0.0
  %733 = vmatprep.subr.mxu0 0.0
  %734 = vmatpush1.msra.mxu0 0.0
  %735 = vmatprep.subr.mxu0 0.0
  %736 = vmatpush1.msra.mxu0 0.0
  %737 = vmatprep.subr.mxu0 0.0
  %738 = vmatpush1.msra.mxu0 0.0
  %739 = vmatprep.subr.mxu0 0.0
  %740 = vmatpush1.msra.mxu0 0.0
  %741 = vmatprep.subr.mxu0 0.0
  %742 = vmatpush1.msra.mxu0 0.0
  %743 = vmatprep.subr.mxu0 0.0
  %744 = vmatpush1.msra.mxu0 0.0
  %745 = vmatprep.subr.mxu0 0.0
  %746 = vmatpush1.msra.mxu0 0.0
  %747 = vmatprep.subr.mxu0 0.0
  %748 = vmatpush1.msra.mxu0 0.0
  %749 = vmatprep.subr.mxu0 0.0
  %750 = vmatpush1.msra.mxu0 0.0
  %751 = vmatprep.subr.mxu0 0.0
  %752 = vmatpush1.msra.mxu0 0.0
  %753 = vmatprep.subr.mxu0 0.0
  %754 = vmatpush1.msra.mxu0 0.0
  %755 = vmatprep.subr.mxu0 0.0
  %756 = vmatpush1.msra.mxu0 0.0
  %757 = vmatprep.subr.mxu0 0.0
  %758 = vmatpush1.msra.mxu0 0.0
  %759 = vmatprep.subr.mxu0 0.0
  %760 = vmatpush1.msra.mxu0 0.0
  %761 = vmatprep.subr.mxu0 0.0
  %762 = vmatpush1.msra.mxu0 0.0
  %763 = vmatprep.subr.mxu0 0.0
  %764 = vmatpush1.msra.mxu0 0.0
  %765 = vmatprep.subr.mxu0 0.0
  %766 = vmatpush1.msra.mxu0 0.0
  %767 = vmatprep.subr.mxu0 0.0
  %768 = vmatpush1.msra.mxu0 0.0
  %769 = vmatprep.subr.mxu0 0.0
  %770 = vmatpush1.msra.mxu0 0.0
  %771 = vmatprep.subr.mxu0 0.0
  %772 = vmatpush1.msra.mxu0 0.0
  %773 = vmatprep.subr.mxu0 0.0
  %774 = vmatpush1.msra.mxu0 0.0
  %775 = vmatprep.mubr.f32.mxu0 0.0
  %v776 = vand.u32 %v50, 4294901760
  %777 = vmatmul.mubr.f32.gmra.mrb[0].mxu0 %v776
  %v778 = vpop.f32.mrb[0].mxu0
  %v779 = vadd.f32 %v665, %v778
  %v780 = vpop.f32.mrb[0].mxu0
  %781 = vmatprep.mubr.f32.mxu0 0.0
  %v782 = vand.u32 %v53, 4294901760
  %783 = vmatmul.mubr.f32.gmra.mrb[0].mxu0 %v782
  %v784 = vpop.f32.mrb[0].mxu0
  %v785 = vadd.f32 %v671, %v784
  %v786 = vpop.f32.mrb[0].mxu0
  %787 = vmatprep.mubr.f32.mxu0 0.0
  %v788 = vand.u32 %v56, 4294901760
  %789 = vmatmul.mubr.f32.gmra.mrb[0].mxu0 %v788
  %v790 = vpop.f32.mrb[0].mxu0
  %v791 = vadd.f32 %v677, %v790
  %v792 = vpop.f32.mrb[0].mxu0
  %793 = vmatprep.mubr.f32.mxu0 0.0
  %v794 = vand.u32 %v59, 4294901760
  %795 = vmatmul.mubr.f32.gmra.mrb[0].mxu0 %v794
  %v796 = vpop.f32.mrb[0].mxu0
  %v797 = vadd.f32 %v683, %v796
  %v798 = vpop.f32.mrb[0].mxu0
  %799 = vmatprep.mubr.f32.mxu0 0.0
  %v800 = vand.u32 %v62, 4294901760
  %801 = vmatmul.mubr.f32.gmra.mrb[0].mxu0 %v800
  %v802 = vpop.f32.mrb[0].mxu0
  %v803 = vadd.f32 %v689, %v802
  %v804 = vpop.f32.mrb[0].mxu0
  %805 = vmatprep.mubr.f32.mxu0 0.0
  %v806 = vand.u32 %v65, 4294901760
  %807 = vmatmul.mubr.f32.gmra.mrb[0].mxu0 %v806
  %v808 = vpop.f32.mrb[0].mxu0
  %v809 = vadd.f32 %v695, %v808
  %v810 = vpop.f32.mrb[0].mxu0
  %811 = vmatprep.mubr.f32.mxu0 0.0
  %v812 = vand.u32 %v68, 4294901760
  %813 = vmatmul.mubr.f32.gmra.mrb[0].mxu0 %v812
  %v814 = vpop.f32.mrb[0].mxu0
  %v815 = vadd.f32 %v701, %v814
  %v816 = vpop.f32.mrb[0].mxu0
  %817 = vmatprep.mubr.f32.mxu0 0.0
  %v818 = vand.u32 %v71, 4294901760
  %819 = vmatmul.mubr.f32.gmra.mrb[0].mxu0 %v818
  %v820 = vpop.f32.mrb[0].mxu0
  %v821 = vadd.f32 %v707, %v820
  %v822 = vpop.f32.mrb[0].mxu0
  %823 = vdwg.mxu0
  %v824 = vld [vmem:[%s2] sm:$0x1]
  %v825 = vld [vmem:[%s2 + $0x1] sm:$0x1]
  %v826 = vld [vmem:[%s2 + $0x2] sm:$0x1]
  %v827 = vlaneseq
  %v828 = vshrl.u32 %v827, 7
  %v829 = vsub.s32 0, %v828
  %v830 = vrot.slane %v824, %v829
  %v831 = vsub.f32 %v779, %v830
  %v832 = vsub.f32 %v785, %v830
  %v833 = vsub.f32 %v791, %v830
  %v834 = vsub.f32 %v797, %v830
  %v835 = vsub.f32 %v803, %v830
  %v836 = vsub.f32 %v809, %v830
  %v837 = vsub.f32 %v815, %v830
  %v838 = vsub.f32 %v821, %v830
  %v839 = vlaneseq
  %v840 = vshrl.u32 %v839, 7
  %v841 = vsub.s32 0, %v840
  %v842 = vrot.slane %v825, %v841
  %v843 = vmul.f32 %v831, %v842
  %v844 = vmul.f32 %v832, %v842
  %v845 = vmul.f32 %v833, %v842
  %v846 = vmul.f32 %v834, %v842
  %v847 = vmul.f32 %v835, %v842
  %v848 = vmul.f32 %v836, %v842
  %v849 = vmul.f32 %v837, %v842
  %v850 = vmul.f32 %v838, %v842
  %v851 = vmul.f32 %v843, %v843
  %v852 = vmul.f32 %v844, %v844
  %v853 = vmul.f32 %v845, %v845
  %v854 = vmul.f32 %v846, %v846
  %v855 = vmul.f32 %v847, %v847
  %v856 = vmul.f32 %v848, %v848
  %v857 = vmul.f32 %v849, %v849
  %v858 = vmul.f32 %v850, %v850
  %v859 = vsub.f32 0.0, %v851
  %v860 = vsub.f32 0.0, %v852
  %v861 = vsub.f32 0.0, %v853
  %v862 = vsub.f32 0.0, %v854
  %v863 = vsub.f32 0.0, %v855
  %v864 = vsub.f32 0.0, %v856
  %v865 = vsub.f32 0.0, %v857
  %v866 = vsub.f32 0.0, %v858
  %v867 = vmul.f32 %v859, 1.442695
  %v868 = vpow.pop %v867
  %v869 = vmul.f32 %v860, 1.442695
  %v870 = vpow.pop %v869
  %v871 = vmul.f32 %v861, 1.442695
  %v872 = vpow.pop %v871
  %v873 = vmul.f32 %v862, 1.442695
  %v874 = vpow.pop %v873
  %v875 = vmul.f32 %v863, 1.442695
  %v876 = vpow.pop %v875
  %v877 = vmul.f32 %v864, 1.442695
  %v878 = vpow.pop %v877
  %v879 = vmul.f32 %v865, 1.442695
  %v880 = vpow.pop %v879
  %v881 = vmul.f32 %v866, 1.442695
  %v882 = vpow.pop %v881
  %v883 = vlaneseq
  %v884 = vshrl.u32 %v883, 7
  %v885 = vsub.s32 0, %v884
  %v886 = vrot.slane %v826, %v885
  %v887 = vmul.f32 %v868, %v886
  %v888 = vmul.f32 %v870, %v886
  %v889 = vmul.f32 %v872, %v886
  %v890 = vmul.f32 %v874, %v886
  %v891 = vmul.f32 %v876, %v886
  %v892 = vmul.f32 %v878, %v886
  %v893 = vmul.f32 %v880, %v886
  %v894 = vmul.f32 %v882, %v886
  %895 = vst [vmem:[%s3] sm:$0xff] %v887
  %896 = vst [vmem:[%s3 + $0x8] sm:$0xff] %v888
  %897 = vst [vmem:[%s3 + $0x10] sm:$0xff] %v889
  %898 = vst [vmem:[%s3 + $0x18] sm:$0xff] %v890
  %899 = vst [vmem:[%s3 + $0x20] sm:$0xff] %v891
  %900 = vst [vmem:[%s3 + $0x28] sm:$0xff] %v892
  %901 = vst [vmem:[%s3 + $0x30] sm:$0xff] %v893
  %902 = vst [vmem:[%s3 + $0x38] sm:$0xff] %v894
  // Predicated region
  $region14: #{rd_encoder_forward.1} parent=0 // pred_check
    _
  $region15: #{rd_encoder_forward.1} parent=0 // pred_check_branch
    %904 = sbr.rel (0) target = $region17
  $region16: #{rd_encoder_forward.1} parent=0 // pred_region
    _
  $region17: #{rd_encoder_forward.1} parent=0 // pred_fallthru
    _
  // Predicated region
  $region18: #{rd_encoder_forward.1} parent=0 // pred_check
    _
  $region19: #{rd_encoder_forward.1} parent=0 // pred_check_branch
    %906 = sbr.rel (0) target = $region21
  $region20: #{rd_encoder_forward.1} parent=0 // pred_region
    _
  $region21: #{rd_encoder_forward.1} parent=0 // pred_fallthru
    _

</llo_original>
